<compile_context>
chip_gen: v7x
topology: tpu7x:2x2x1
jax: 0.10.0
libtpu: 0.0.40
codegen_flags: <defaults>
</compile_context>

<pallas_src>
import numpy as np
import jax
import jax.numpy as jnp
from jax.experimental import pallas as pl
from jax.experimental.pallas import tpu as pltpu

# ----------------------------------------------------------------------------- config
DIM = 16          # Match2Match input_dim
HEADS = 4
DIM_HEAD = 4
BOTTLEN = 9       # number of correlation layers (Linear(9 -> 16))
N_LAYERS = 4
MULT = 4
LN_EPS = 1e-5
SCALE = DIM_HEAD ** (-0.5)   # 0.5
VMEM_LIMIT = 64 * 1024 * 1024


# ----------------------------------------------------------------------------- in-kernel helpers
def _layer_norm(x, g, b):
    mu = jnp.mean(x, axis=-1, keepdims=True)
    var = jnp.mean((x - mu) ** 2, axis=-1, keepdims=True)
    return (x - mu) * jax.lax.rsqrt(var + LN_EPS) * g + b


def _softmax_axis0(x):
    m = jnp.max(x, axis=0, keepdims=True)
    e = jnp.exp(x - m)
    return e / jnp.sum(e, axis=0, keepdims=True)


def _erf(x):
    # Abramowitz & Stegun 7.1.26 (|err| < 1.5e-7): float32-accurate stand-in for erf so
    # that nn.GELU() (exact erf GELU) semantics are reproduced in-kernel.
    a1, a2, a3, a4, a5 = 0.254829592, -0.284496736, 1.421413741, -1.453152027, 1.061405429
    p = 0.3275911
    s = jnp.where(x >= 0.0, 1.0, -1.0)
    ax = jnp.abs(x)
    t = 1.0 / (1.0 + p * ax)
    poly = ((((a5 * t + a4) * t + a3) * t + a2) * t + a1) * t
    return s * (1.0 - poly * jnp.exp(-ax * ax))


def _gelu_exact(x):
    return 0.5 * x * (1.0 + _erf(x * 0.7071067811865476))


# ----------------------------------------------------------------------------- kernels
def _corr_kernel(s_ref, t_ref, o_ref):
    """Cosine-similarity correlation + ReLU for one (batch, layer) grid point."""
    s = s_ref[0, 0]                                   # (HW, C)
    t = t_ref[0, 0]                                   # (HW, C)
    # torch cosine_similarity: x / max(||x||, eps); rsqrt goes to the EUP slot.
    s = s * jax.lax.rsqrt(jnp.maximum(jnp.sum(s * s, axis=-1, keepdims=True), 1e-16))
    t = t * jax.lax.rsqrt(jnp.maximum(jnp.sum(t * t, axis=-1, keepdims=True), 1e-16))
    c = jax.lax.dot_general(s, t, (((1,), (1,)), ((), ())),
                            preferred_element_type=jnp.float32)   # (HW_src, HW_trg)
    o_ref[0, 0] = jnp.maximum(c, 0.0)


def _m2m_kernel(tok_ref, embw_ref, embb_ref, freq_ref, prot_ref, e4_ref, rpair_ref,
                ln1g_ref, ln1b_ref, wqkv_ref, wql_ref, wkl_ref, wr_ref, br_ref,
                wo_ref, bo_ref, ln2g_ref, ln2b_ref, w1_ref, b1_ref, w2_ref, b2_ref,
                origw_ref, origb_ref, o_ref):
    """Fused Match2Match trunk for one batch element:
       embedding Linear(9->16) + 4 transformer layers + to_original Linear(16->1).
       Tokens stay resident in VMEM across all layers."""
    D = DIM
    tok = tok_ref[0]                                           # (N, L)
    N = tok.shape[0]

    # to_embedding
    x = jnp.dot(tok, embw_ref[...], preferred_element_type=jnp.float32) + embb_ref[...]

    # rotary tables from an iota (sin/cos on EUP); identical pattern across heads.
    pos = jax.lax.broadcasted_iota(jnp.int32, (N, D), 0).astype(jnp.float32)
    ang = pos * freq_ref[...]                                  # (N, D)
    cos = jnp.cos(ang)
    sin = jnp.sin(ang)

    prot = prot_ref[...]    # rotate_half as a signed permutation matrix (D, D)
    e4 = e4_ref[...]        # per-head broadcast (H, D)
    rpair = rpair_ref[...]  # pair-sum reduce '(d r) -> d' (D, D//2)

    for li in range(N_LAYERS):                                  # static unroll, weights ref[li]
        # ---------------- PreNorm + FastAttention + residual ----------------
        xn = _layer_norm(x, ln1g_ref[li], ln1b_ref[li])
        qkv = jnp.dot(xn, wqkv_ref[li], preferred_element_type=jnp.float32)   # (N, 3D)
        q = qkv[:, :D]
        k = qkv[:, D:2 * D]
        v = qkv[:, 2 * D:]

        # rotary only on the aggregation path (reference: logits and the `r = r + q`
        # residual use the pre-rotary q / k).
        q_rot = q * cos + jnp.dot(q, prot, preferred_element_type=jnp.float32) * sin
        k_rot = k * cos + jnp.dot(k, prot, preferred_element_type=jnp.float32) * sin

        q_attn = _softmax_axis0(
            jnp.dot(q, wql_ref[li], preferred_element_type=jnp.float32) * SCALE)     # (N, H)
        q_attn_e = jnp.dot(q_attn, e4, preferred_element_type=jnp.float32)            # (N, D)
        global_q = jnp.sum(q_attn_e * q_rot, axis=0, keepdims=True)                   # (1, D)

        k_red = jnp.dot(k * global_q, rpair, preferred_element_type=jnp.float32)      # (N, D//2)
        k_attn = _softmax_axis0(
            jnp.dot(k_red, wkl_ref[li], preferred_element_type=jnp.float32) * SCALE)
        k_attn_e = jnp.dot(k_attn, e4, preferred_element_type=jnp.float32)
        global_k = jnp.sum(k_attn_e * k_rot, axis=0, keepdims=True)                   # (1, D)

        u_red = jnp.dot(v * global_k, rpair, preferred_element_type=jnp.float32)      # (N, D//2)
        r = jnp.dot(u_red, wr_ref[li], preferred_element_type=jnp.float32) + br_ref[li] + q
        x = x + jnp.dot(r, wo_ref[li], preferred_element_type=jnp.float32) + bo_ref[li]

        # ---------------- PreNorm + FeedForward + residual ----------------
        yn = _layer_norm(x, ln2g_ref[li], ln2b_ref[li])
        h = _gelu_exact(jnp.dot(yn, w1_ref[li], preferred_element_type=jnp.float32) + b1_ref[li])
        x = x + jnp.dot(h, w2_ref[li], preferred_element_type=jnp.float32) + b2_ref[li]

    # to_original: Linear(16 -> 1)
    o_ref[0] = (jnp.dot(x, origw_ref[...], preferred_element_type=jnp.float32)
                + origb_ref[...])


def _interp_kernel(c_ref, k_ref, o_ref):
    """4-D bilinear upsample per batch: out = K @ corr @ K^T (single Kronecker factor K,
       right multiplication via dot_general contraction - no transposed copy of K)."""
    K = k_ref[...]
    tmp = jax.lax.dot_general(c_ref[0], K, (((1,), (1,)), ((), ())),
                              preferred_element_type=jnp.float32)     # (HW, HWf)
    o_ref[0] = jnp.dot(K, tmp, preferred_element_type=jnp.float32)    # (HWf, HWf)


# ----------------------------------------------------------------------------- pallas_call wrappers
def _full_spec(a):
    nd = a.ndim
    return pl.BlockSpec(a.shape, lambda *_, _nd=nd: (0,) * _nd)


def correlation_all(src_all, trg_all):
    """src_all, trg_all: (B, L, HW, C) channels-last features -> relu(cos-sim) (B, L, HW, HW)."""
    B, L, HW, C = src_all.shape
    return pl.pallas_call(
        _corr_kernel,
        out_shape=jax.ShapeDtypeStruct((B, L, HW, HW), jnp.float32),
        grid=(B, L),
        in_specs=[pl.BlockSpec((1, 1, HW, C), lambda b, l: (b, l, 0, 0)),
                  pl.BlockSpec((1, 1, HW, C), lambda b, l: (b, l, 0, 0))],
        out_specs=pl.BlockSpec((1, 1, HW, HW), lambda b, l: (b, l, 0, 0)),
        compiler_params=pltpu.CompilerParams(
            dimension_semantics=("parallel", "parallel"),
            vmem_limit_bytes=VMEM_LIMIT),
    )(src_all, trg_all)


def m2m_transformer(tok, p):
    """tok: (B, N, 9) correlation tokens -> refined (B, N, 1)."""
    B, N, L = tok.shape
    sp = p['stacked']
    args = [tok, p['emb_w'], p['emb_b'], p['freqs'], p['prot'], p['e4'], p['rpair'],
            sp['ln1_g'], sp['ln1_b'], sp['w_qkv'], sp['w_ql'], sp['w_kl'],
            sp['w_r'], sp['b_r'], sp['w_o'], sp['b_o'],
            sp['ln2_g'], sp['ln2_b'], sp['w1'], sp['b1'], sp['w2'], sp['b2'],
            p['orig_w'], p['orig_b']]
    in_specs = [pl.BlockSpec((1, N, L), lambda i: (i, 0, 0))]
    in_specs += [_full_spec(a) for a in args[1:]]
    return pl.pallas_call(
        _m2m_kernel,
        out_shape=jax.ShapeDtypeStruct((B, N, 1), jnp.float32),
        grid=(B,),
        in_specs=in_specs,
        out_specs=pl.BlockSpec((1, N, 1), lambda i: (i, 0, 0)),
        compiler_params=pltpu.CompilerParams(
            dimension_semantics=("parallel",),
            vmem_limit_bytes=VMEM_LIMIT),
    )(*args)


def interpolate4d(corr, K):
    """corr: (B, n1, n1) flattened 4-D correlation; K: (N1, n1) = kron(M_h, M_w)."""
    B, n1, _ = corr.shape
    N1 = K.shape[0]
    return pl.pallas_call(
        _interp_kernel,
        out_shape=jax.ShapeDtypeStruct((B, N1, N1), jnp.float32),
        grid=(B,),
        in_specs=[pl.BlockSpec((1, n1, n1), lambda i: (i, 0, 0)),
                  _full_spec(K)],
        out_specs=pl.BlockSpec((1, N1, N1), lambda i: (i, 0, 0)),
        compiler_params=pltpu.CompilerParams(
            dimension_semantics=("parallel",),
            vmem_limit_bytes=VMEM_LIMIT),
    )(corr, K)


# ----------------------------------------------------------------------------- glue: constants & params
def make_head_constants(heads=HEADS, dh=DIM_HEAD):
    D = heads * dh
    # rotate_half as a signed permutation: y = x @ P, y[2i] = -x[2i+1], y[2i+1] = x[2i]
    P = np.zeros((D, D), np.float32)
    for i in range(D // 2):
        P[2 * i + 1, 2 * i] = -1.0
        P[2 * i, 2 * i + 1] = 1.0
    # per-head broadcast: (N, heads) @ E -> (N, D)
    E = np.zeros((heads, D), np.float32)
    for h in range(heads):
        E[h, h * dh:(h + 1) * dh] = 1.0
    # pair-sum reduce 'h (d r) -> h d' (r=2): (N, D) @ R -> (N, D//2)
    R = np.zeros((D, D // 2), np.float32)
    for h in range(heads):
        for j in range(dh // 2):
            for r in range(2):
                R[h * dh + 2 * j + r, h * (dh // 2) + j] = 1.0
    return jnp.asarray(P), jnp.asarray(E), jnp.asarray(R)


def rotary_freqs(heads=HEADS, dh=DIM_HEAD, max_freq=10.0):
    # RotaryEmbedding(dim=4, freqs_for='pixel'): freqs = linspace(1, max_freq/2, dim//2)*pi,
    # interleaved '(n r)' r=2, identical per head.  cos/sin computed in-kernel from iota.
    half = dh // 2
    f = np.linspace(1.0, max_freq / 2.0, half).astype(np.float32) * np.pi   # (dh//2,)
    f = np.repeat(f, 2)                                                     # (dh,)
    f = np.tile(f, heads)                                                   # (D,)
    return jnp.asarray(f.reshape(1, heads * dh))


def upsample_matrix(s, S):
    # 1-D bilinear interpolation matrix, align_corners=True, s -> S
    M = np.zeros((S, s), np.float32)
    if s == 1:
        M[:, 0] = 1.0
        return M
    for i in range(S):
        x = i * (s - 1) / (S - 1)
        x0 = int(np.floor(x))
        x1 = min(x0 + 1, s - 1)
        w = x - x0
        M[i, x0] += 1.0 - w
        M[i, x1] += w
    return M


def init_layer_params(key):
    dim, heads, dh, inner = DIM, HEADS, DIM_HEAD, HEADS * DIM_HEAD
    ks = jax.random.split(key, 11)
    rnd = lambda k, shp, s=0.1: jax.random.normal(k, shp, dtype=jnp.float32) * s
    w_qkv = rnd(ks[0], (dim, inner * 3))
    w_q = np.asarray(rnd(ks[1], (dh,)))            # to_q_attn_logits (no bias)
    w_k = np.asarray(rnd(ks[2], (dh // 2,)))       # to_k_attn_logits (no bias)
    w_r_t = np.asarray(rnd(ks[3], (dh // 2, dh)))  # to_r weight, stored (in, out)
    b_r = np.asarray(rnd(ks[4], (dh,)))
    w_o = rnd(ks[5], (inner, dim))
    b_o = rnd(ks[6], (dim,))
    w1 = rnd(ks[7], (dim, dim * MULT))
    b1 = rnd(ks[8], (dim * MULT,))
    w2 = rnd(ks[9], (dim * MULT, dim))
    b2 = rnd(ks[10], (dim,))
    # expand head-wise linears into block-diagonal matrices (glue, done once)
    w_ql = np.zeros((inner, heads), np.float32)
    w_kl = np.zeros((inner // 2, heads), np.float32)
    w_r_big = np.zeros((inner // 2, inner), np.float32)
    for h in range(heads):
        w_ql[h * dh:(h + 1) * dh, h] = w_q
        w_kl[h * (dh // 2):(h + 1) * (dh // 2), h] = w_k
        w_r_big[h * (dh // 2):(h + 1) * (dh // 2), h * dh:(h + 1) * dh] = w_r_t
    b_r_tiled = np.tile(b_r, heads)
    return dict(
        ln1_g=jnp.ones((1, dim), jnp.float32), ln1_b=jnp.zeros((1, dim), jnp.float32),
        w_qkv=w_qkv, w_ql=jnp.asarray(w_ql), w_kl=jnp.asarray(w_kl),
        w_r=jnp.asarray(w_r_big), b_r=jnp.asarray(b_r_tiled).reshape(1, inner),
        w_o=w_o, b_o=b_o.reshape(1, dim),
        ln2_g=jnp.ones((1, dim), jnp.float32), ln2_b=jnp.zeros((1, dim), jnp.float32),
        w1=w1, b1=b1.reshape(1, dim * MULT), w2=w2, b2=b2.reshape(1, dim))


def init_params(key, *, H, W):
    ks = jax.random.split(key, N_LAYERS + 4)
    rnd = lambda k, shp, s=0.1: jax.random.normal(k, shp, dtype=jnp.float32) * s
    layers = [init_layer_params(ks[4 + i]) for i in range(N_LAYERS)]
    # stack every per-layer tensor along a leading (N_LAYERS,) axis so the fused
    # transformer kernel fetches each weight array exactly once.
    stacked = {name: jnp.stack([lp[name] for lp in layers], axis=0) for name in layers[0]}
    prot, e4, rpair = make_head_constants()
    K = np.kron(upsample_matrix(H, 2 * H), upsample_matrix(W, 2 * W)).astype(np.float32)
    return dict(
        emb_w=rnd(ks[0], (BOTTLEN, DIM)), emb_b=rnd(ks[1], (DIM,)).reshape(1, DIM),
        orig_w=rnd(ks[2], (DIM, 1)), orig_b=rnd(ks[3], (1,)).reshape(1, 1),
        stacked=stacked,
        prot=prot, e4=e4, rpair=rpair,
        freqs=rotary_freqs(),
        K=jnp.asarray(K))


# ----------------------------------------------------------------------------- forward passes
def _stack_feats(feats):
    """list of NCHW features -> (B, L, HW, Cmax) channels-last, zero-padded on C
       (zero channels do not change cosine similarity)."""
    B, _, H, W = feats[0].shape
    HW = H * W
    Cmax = max(int(f.shape[1]) for f in feats)
    outs = []
    for f in feats:
        C = int(f.shape[1])
        x = jnp.transpose(f.reshape(B, C, HW), (0, 2, 1))     # (B, HW, C)
        if C < Cmax:
            x = jnp.pad(x, ((0, 0), (0, 0), (0, Cmax - C)))
        outs.append(x)
    return jnp.stack(outs, axis=1)                            # (B, L, HW, Cmax)


def match2match_forward(src_feats, trg_feats, p):
    B, _, H, W = src_feats[0].shape
    HW = H * W
    N = HW * HW

    # Geometry.cosine_similarity + stack + squeeze + ReLU (all fused into kernel 1)
    src_all = _stack_feats(src_feats)
    trg_all = _stack_feats(trg_feats)
    corr = correlation_all(src_all, trg_all)                  # (B, L, HW, HW)
    L = corr.shape[1]

    # 'b c h1 w1 h2 w2 -> b (h1 w1 h2 w2) c' (cheap XLA transpose; embedding Linear is
    # fused into the transformer kernel below)
    tok = jnp.transpose(corr.reshape(B, L, N), (0, 2, 1))     # (B, N, L)

    # embedding + 4 x (PreNorm FastAttention + res, PreNorm FeedForward + res) + to_original
    refined = m2m_transformer(tok, p)                         # (B, N, 1)
    corr4 = refined.reshape(B, HW, HW)                        # squeeze(1), (h1 w1) x (h2 w2)

    # Geometry.interpolate4d (2x bilinear, align_corners=True) then view(bsz, hf*wf, hf*wf)
    return interpolate4d(corr4, p['K'])                       # (B, 4*HW, 4*HW)


def transformatcher_forward(src_feats, trg_feats, params):
    # TODO(synk): ResNet backbone feature extraction omitted (needs pretrained checkpoint);
    # src_feats/trg_feats stand in for extract_bottleneck_features() outputs.
    correlation_ts = match2match_forward(src_feats, trg_feats, params)
    return correlation_ts, src_feats, trg_feats


# ----------------------------------------------------------------------------- main
if __name__ == "__main__":
    B, L, C, H, W = 2, BOTTLEN, 8, 4, 4          # small shapes; L must be 9 (Linear(9, 16))
    key = jax.random.PRNGKey(0)
    keys = jax.random.split(key, 2 * L + 1)
    src_feats = [jax.random.normal(keys[i], (B, C, H, W), jnp.float32) for i in range(L)]
    trg_feats = [jax.random.normal(keys[L + i], (B, C, H, W), jnp.float32) for i in range(L)]
    params = init_params(keys[2 * L], H=H, W=W)

    corr_ts, sf, tf = transformatcher_forward(src_feats, trg_feats, params)
    jax.block_until_ready(corr_ts)
    assert corr_ts.shape == (B, (2 * H) * (2 * W), (2 * H) * (2 * W))
    print("KERNEL_OK")
</pallas_src>

<mosaic_0001>
module attributes {stable_mosaic.version = 11 : i64} {
  func.func @_corr_kernel(%arg0: i32, %arg1: i32, %arg2: memref<1x1x16x8xf32, #tpu.memory_space<vmem>>, %arg3: memref<1x1x16x8xf32, #tpu.memory_space<vmem>>, %arg4: memref<1x1x16x16xf32, #tpu.memory_space<vmem>>) attributes {dimension_semantics = [#tpu.dimension_semantics<parallel>, #tpu.dimension_semantics<parallel>], iteration_bounds = array<i64: 2, 9>, scalar_prefetch = 0 : i64, scratch_operands = 0 : i64, tpu.core_type = #tpu.core_type<tc>, window_params = [{transform_indices = @transform_0, window_bounds = array<i64: 1, 1, 16, 8>}, {transform_indices = @transform_1, window_bounds = array<i64: 1, 1, 16, 8>}, {transform_indices = @transform_2, window_bounds = array<i64: 1, 1, 16, 16>}]} {
    %c0 = arith.constant 0 : index
    %c0_0 = arith.constant 0 : index
    %c0_1 = arith.constant 0 : index
    %c0_2 = arith.constant 0 : index
    %0 = vector.load %arg2[%c0, %c0_0, %c0_1, %c0_2] : memref<1x1x16x8xf32, #tpu.memory_space<vmem>>, vector<1x1x16x8xf32>
    %1 = vector.shape_cast %0 : vector<1x1x16x8xf32> to vector<16x8xf32>
    %c0_3 = arith.constant 0 : index
    %c0_4 = arith.constant 0 : index
    %c0_5 = arith.constant 0 : index
    %c0_6 = arith.constant 0 : index
    %2 = vector.load %arg3[%c0_3, %c0_4, %c0_5, %c0_6] : memref<1x1x16x8xf32, #tpu.memory_space<vmem>>, vector<1x1x16x8xf32>
    %3 = vector.shape_cast %2 : vector<1x1x16x8xf32> to vector<16x8xf32>
    %4 = arith.mulf %1, %1 : vector<16x8xf32>
    %cst = arith.constant dense<0.000000e+00> : vector<16xf32>
    %5 = vector.multi_reduction <add>, %4, %cst [1] : vector<16x8xf32> to vector<16xf32>
    %6 = vector.shape_cast %5 : vector<16xf32> to vector<16x1xf32>
    %cst_7 = arith.constant 1.000000e-16 : f32
    %7 = vector.broadcast %cst_7 : f32 to vector<16x1xf32>
    %8 = arith.maximumf %6, %7 : vector<16x1xf32>
    %9 = math.rsqrt %8 : vector<16x1xf32>
    %10 = vector.broadcast %9 : vector<16x1xf32> to vector<16x8xf32>
    %11 = arith.mulf %1, %10 : vector<16x8xf32>
    %12 = arith.mulf %3, %3 : vector<16x8xf32>
    %cst_8 = arith.constant dense<0.000000e+00> : vector<16xf32>
    %13 = vector.multi_reduction <add>, %12, %cst_8 [1] : vector<16x8xf32> to vector<16xf32>
    %14 = vector.shape_cast %13 : vector<16xf32> to vector<16x1xf32>
    %cst_9 = arith.constant 1.000000e-16 : f32
    %15 = vector.broadcast %cst_9 : f32 to vector<16x1xf32>
    %16 = arith.maximumf %14, %15 : vector<16x1xf32>
    %17 = math.rsqrt %16 : vector<16x1xf32>
    %18 = vector.broadcast %17 : vector<16x1xf32> to vector<16x8xf32>
    %19 = arith.mulf %3, %18 : vector<16x8xf32>
    %cst_10 = arith.constant dense<0.000000e+00> : vector<16x16xf32>
    %20 = tpu.matmul %11, %19, %cst_10 {dimension_numbers = #tpu.dot_dimension_numbers<[1], [1], [0], [0], [0, 0, 1, 0], [], []>} : vector<16x8xf32>, vector<16x8xf32>, vector<16x16xf32> -> vector<16x16xf32>
    %cst_11 = arith.constant 0.000000e+00 : f32
    %21 = vector.broadcast %cst_11 : f32 to vector<16x16xf32>
    %22 = arith.maximumf %20, %21 : vector<16x16xf32>
    %c0_12 = arith.constant 0 : index
    %c0_13 = arith.constant 0 : index
    %c0_14 = arith.constant 0 : index
    %c0_15 = arith.constant 0 : index
    %23 = vector.load %arg4[%c0_12, %c0_13, %c0_14, %c0_15] : memref<1x1x16x16xf32, #tpu.memory_space<vmem>>, vector<1x1x16x16xf32>
    %24 = vector.shape_cast %23 : vector<1x1x16x16xf32> to vector<16x16xf32>
    %25 = vector.shape_cast %22 : vector<16x16xf32> to vector<1x1x16x16xf32>
    tpu.vector_store %arg4[%c0_12, %c0_13, %c0_14, %c0_15], %25 {strides = array<i32>} : memref<1x1x16x16xf32, #tpu.memory_space<vmem>>, vector<1x1x16x16xf32>,
    return
  }
  func.func @transform_0(%arg0: i32, %arg1: i32) -> (i32, i32, i32, i32) {
    %c0_i32 = arith.constant 0 : i32
    %c0_i32_0 = arith.constant 0 : i32
    %c0_i32_1 = arith.constant 0 : i32
    return %arg0, %arg1, %c0_i32, %c0_i32_0 : i32, i32, i32, i32
  }
  func.func @transform_1(%arg0: i32, %arg1: i32) -> (i32, i32, i32, i32) {
    %c0_i32 = arith.constant 0 : i32
    %c0_i32_0 = arith.constant 0 : i32
    %c0_i32_1 = arith.constant 0 : i32
    return %arg0, %arg1, %c0_i32, %c0_i32_0 : i32, i32, i32, i32
  }
  func.func @transform_2(%arg0: i32, %arg1: i32) -> (i32, i32, i32, i32) {
    %c0_i32 = arith.constant 0 : i32
    %c0_i32_0 = arith.constant 0 : i32
    %c0_i32_1 = arith.constant 0 : i32
    return %arg0, %arg1, %c0_i32, %c0_i32_0 : i32, i32, i32, i32
  }
}

</mosaic_0001>

<llo_original>
// kernel: tpu_custom_call.1
$region0: #{tpu_custom_call.1}
  #allocation0 [shape = 'u32[]', space=smem, size = 0x4, offset = 0x4, fixed_abs, tag = 'smem constant byte address 0x4 - core index']
  #allocation1 [shape = 'u32[144,128]{1,0:T(1,128)}', space=vmem, size = 0x12000, scoped, tag = 'internal scratch']
  %s0 = inlined_call_operand.hbm [shape: f32[2,9,16,8], index: 0, kind: input, shape index: {}]
  %s1 = inlined_call_operand.hbm [shape: f32[2,9,16,8], index: 1, kind: input, shape index: {}]
  %s2 = inlined_call_operand.hbm [shape: f32[2,9,16,16], index: 2, kind: output, shape index: {}]
  %s3 = sld [smem:[#allocation0]]
  $region49: #{tpu_custom_call.1} parent=0
    _
  %s5 = ssub.s32 1, %s3
  %s6 = scalar_select 0, %s5, %s3
  $region1: #{tpu_custom_call.1} parent=0
    #allocation2 [shape = 'u8[16384]{0}', space=vmem, size = 0x4000, scoped, tag = 'input window, operand 0']
    #allocation3 [shape = 's32[2]{0}', space=sflag, size = 0x8, scoped, tag = 'scoped memory for tpu_custom_call.1']
    #allocation4 [shape = 's32[2]{0}', space=sflag, size = 0x8, scoped, tag = 'scoped memory for tpu_custom_call.1']
    #allocation5 [shape = 'u8[16384]{0}', space=vmem, size = 0x4000, scoped, tag = 'input window, operand 1']
    #allocation6 [shape = 's32[2]{0}', space=sflag, size = 0x8, scoped, tag = 'scoped memory for tpu_custom_call.1']
    #allocation7 [shape = 'u8[16384]{0}', space=vmem, size = 0x4000, scoped, tag = 'output window, operand 0']
    %7 = vsyncpa [#allocation3], 0
    %s8 = scalar_lea.sflag [#allocation3], 1
    %9 = vsyncpa %s8, 0
    %10 = vsyncpa [#allocation6], 0
    %s11 = scalar_lea.sflag [#allocation6], 1
    %12 = vsyncpa %s11, 0
    %13 = vsyncpa [#allocation4], 0
    %s14 = scalar_lea.sflag [#allocation4], 1
    %15 = vsyncpa %s14, 0
    loop: start=0, step=1, limit=20
    $region2: #{tpu_custom_call.1} parent=1 // loop_pre_header
      _
    $region3: #{tpu_custom_call.1} parent=1 // loop_header
      %s17 = sphi 0, %s21
      %p18 = scmp.ge.s32.totalorder %s17, 20
      %s24 = sphi 0, %s36
      %s25 = sphi 0, %s32
      %s26 = sphi 0, %s24
      %s27 = sphi 0, %s25
      %s28 = sphi 0, %s26
      %s29 = sphi 0, %s27
      %s41 = sphi 0, %s43
      %s44 = sphi 0, %s41
      %s45 = sphi 0, %s44
      %s61 = sphi 0, %s45
      %s69 = sphi 0, %s71
      %s72 = sphi 0, %s69
      %s73 = sphi 0, %s72
      %s89 = sphi 0, %s73
      %s97 = sphi 0, %s99
      %s100 = sphi 0, %s97
      %s101 = sphi 0, %s100
      %s117 = sphi 0, %s101
    $region4: #{tpu_custom_call.1} parent=1 // loop_header_branch
      %20 = sbr.rel (%p18) target = $region8
    $region5: #{tpu_custom_call.1} parent=1 // loop_body
      %s22 = ssub.s32 %s17, 1
      %s23 = ssub.s32 %s17, 2
      %s30 = sadd.s32 1, %s25
      %p31 = scmp.ge.s32.totalorder %s30, 9
      %s32 = scalar_select %p31, 0, %s30
      %s33 = sadd.s32 1, %s24
      %s34 = scalar_select %p31, %s33, %s24
      %p35 = scmp.ge.s32.totalorder %s34, 2
      %s36 = scalar_select %p35, 0, %s34
      %s37 = ssub.s32 %s24, %s36
      %s38 = ssub.s32 %s25, %s32
      %s39 = sor.u32 %s37, %s38
      %p40 = scmp.eq.s32.totalorder %s39, 0
      %s42 = sadd.s32 %s41, 1
      %s43 = scalar_select %p40, %s41, %s42
      %p46 = pneg %p40
      %p47 = scmp.eq.s32.totalorder %s17, 17
      %p48 = por %p46, %p47
      %p49 = scmp.ne.s32.totalorder %s41, %s44
      %p50 = scmp.eq.s32.totalorder %s17, 0
      %p51 = por %p49, %p50
      %p52 = scmp.ne.s32.totalorder %s41, %s44
      %p53 = scmp.eq.s32.totalorder %s22, 17
      %p54 = por %p52, %p53
      %p55 = scmp.ne.s32.totalorder %s44, %s45
      %p56 = scmp.eq.s32.totalorder %s22, 0
      %p57 = por %p55, %p56
      %p58 = scmp.ne.s32.totalorder %s44, %s45
      %p59 = scmp.eq.s32.totalorder %s23, 17
      %p60 = por %p58, %p59
      %p62 = scmp.ne.s32.totalorder %s45, %s61
      %p63 = scmp.eq.s32.totalorder %s23, 0
      %p64 = por %p62, %p63
      %s65 = ssub.s32 %s24, %s36
      %s66 = ssub.s32 %s25, %s32
      %s67 = sor.u32 %s65, %s66
      %p68 = scmp.eq.s32.totalorder %s67, 0
      %s70 = sadd.s32 %s69, 1
      %s71 = scalar_select %p68, %s69, %s70
      %p74 = pneg %p68
      %p75 = scmp.eq.s32.totalorder %s17, 17
      %p76 = por %p74, %p75
      %p77 = scmp.ne.s32.totalorder %s69, %s72
      %p78 = scmp.eq.s32.totalorder %s17, 0
      %p79 = por %p77, %p78
      %p80 = scmp.ne.s32.totalorder %s69, %s72
      %p81 = scmp.eq.s32.totalorder %s22, 17
      %p82 = por %p80, %p81
      %p83 = scmp.ne.s32.totalorder %s72, %s73
      %p84 = scmp.eq.s32.totalorder %s22, 0
      %p85 = por %p83, %p84
      %p86 = scmp.ne.s32.totalorder %s72, %s73
      %p87 = scmp.eq.s32.totalorder %s23, 17
      %p88 = por %p86, %p87
      %p90 = scmp.ne.s32.totalorder %s73, %s89
      %p91 = scmp.eq.s32.totalorder %s23, 0
      %p92 = por %p90, %p91
      %s93 = ssub.s32 %s24, %s36
      %s94 = ssub.s32 %s25, %s32
      %s95 = sor.u32 %s93, %s94
      %p96 = scmp.eq.s32.totalorder %s95, 0
      %s98 = sadd.s32 %s97, 1
      %s99 = scalar_select %p96, %s97, %s98
      %p102 = pneg %p96
      %p103 = scmp.eq.s32.totalorder %s17, 17
      %p104 = por %p102, %p103
      %p105 = scmp.ne.s32.totalorder %s97, %s100
      %p106 = scmp.eq.s32.totalorder %s17, 0
      %p107 = por %p105, %p106
      %p108 = scmp.ne.s32.totalorder %s97, %s100
      %p109 = scmp.eq.s32.totalorder %s22, 17
      %p110 = por %p108, %p109
      %p111 = scmp.ne.s32.totalorder %s100, %s101
      %p112 = scmp.eq.s32.totalorder %s22, 0
      %p113 = por %p111, %p112
      %p114 = scmp.ne.s32.totalorder %s100, %s101
      %p115 = scmp.eq.s32.totalorder %s23, 17
      %p116 = por %p114, %p115
      %p118 = scmp.ne.s32.totalorder %s101, %s117
      %p119 = scmp.eq.s32.totalorder %s23, 0
      %p120 = por %p118, %p119
      %p121 = scmp.le.s32.totalorder 1, %s17
      %p122 = scmp.lt.s32.totalorder %s17, 19
      %p123 = pnand %p121, %p122
      %p124 = pneg %p123
      // Predicated region
      $region9: #{tpu_custom_call.1} parent=5 // pred_check
        _
      $region10: #{tpu_custom_call.1} parent=5 // pred_check_branch
        %126 = sbr.rel (%p123) target = $region12
      $region11: #{tpu_custom_call.1} parent=5 // pred_region
        %s127 = ssub.s32 %s17, 1
      $region12: #{tpu_custom_call.1} parent=5 // pred_fallthru
        _
      %p128 = scmp.lt.s32.totalorder %s17, 18
      // Predicated region
      $region13: #{tpu_custom_call.1} parent=5 // pred_check
        %p129 = pneg %p128
      $region14: #{tpu_custom_call.1} parent=5 // pred_check_branch
        %131 = sbr.rel (%p129) target = $region16
      $region15: #{tpu_custom_call.1} parent=5 // pred_region
        // Predicated region
        $region17: #{tpu_custom_call.1} parent=15 // pred_check
          %p132 = pneg %p51
        $region18: #{tpu_custom_call.1} parent=15 // pred_check_branch
          %134 = sbr.rel (%p132) target = $region20
        $region19: #{tpu_custom_call.1} parent=15 // pred_region
          %s135 = sand.u32 %s41, 1
          %s136 = scalar_lea.sflag [#allocation3], %s135
          %s137 = sand.u32 %s41, 1
          %s138 = smul.addr %s137, 16
          %s139 = scalar_lea.vmem [#allocation2], %s138
          %s141 = ssub.s32 256, 256
          %142 = vsyncadd %s136, %s141
          %s143 = smul.addr %s25, 2
          %s144 = smul.addr %s24, 18
          %s145 = sadd.s32 %s143, %s144
          %s146 = smul.addr %s145, 128
          %s147 = scalar_lea.hbm %s0, %s146
          %s148 = sshll.u32 %s139, 4
          %s149 = int_to_ptr.vmem [resolvable:$true] %s148
          %154 = dma.hbm_to_vmem [thread:$0]  %s147, 256, %s149, %s136, 128, 128, 8
        $region20: #{tpu_custom_call.1} parent=15 // pred_fallthru
          _
        // Predicated region
        $region21: #{tpu_custom_call.1} parent=15 // pred_check
          %p155 = pneg %p79
        $region22: #{tpu_custom_call.1} parent=15 // pred_check_branch
          %157 = sbr.rel (%p155) target = $region24
        $region23: #{tpu_custom_call.1} parent=15 // pred_region
          %s158 = sand.u32 %s69, 1
          %s159 = scalar_lea.sflag [#allocation6], %s158
          %s160 = sand.u32 %s69, 1
          %s161 = smul.addr %s160, 16
          %s162 = scalar_lea.vmem [#allocation5], %s161
          %s164 = ssub.s32 256, 256
          %165 = vsyncadd %s159, %s164
          %s166 = smul.addr %s25, 2
          %s167 = smul.addr %s24, 18
          %s168 = sadd.s32 %s166, %s167
          %s169 = smul.addr %s168, 128
          %s170 = scalar_lea.hbm %s1, %s169
          %s171 = sshll.u32 %s162, 4
          %s172 = int_to_ptr.vmem [resolvable:$true] %s171
          %177 = dma.hbm_to_vmem [thread:$0]  %s170, 256, %s172, %s159, 128, 128, 8
        $region24: #{tpu_custom_call.1} parent=15 // pred_fallthru
          _
      $region16: #{tpu_custom_call.1} parent=5 // pred_fallthru
        _
      %p178 = scmp.le.s32.totalorder 1, %s17
      %p179 = scmp.lt.s32.totalorder %s17, 19
      %p180 = pnand %p178, %p179
      %p181 = pneg %p180
      // Predicated region
      $region25: #{tpu_custom_call.1} parent=5 // pred_check
        _
      $region26: #{tpu_custom_call.1} parent=5 // pred_check_branch
        %183 = sbr.rel (%p180) target = $region28
      $region27: #{tpu_custom_call.1} parent=5 // pred_region
        %s184 = ssub.s32 %s17, 1
        %s185 = sand.u32 %s44, 1
        %s186 = scalar_lea.sflag [#allocation3], %s185
        %s187 = sand.u32 %s44, 1
        %s188 = smul.addr %s187, 16
        %s189 = scalar_lea.vmem [#allocation2], %s188
        // Predicated region
        $region29: #{tpu_custom_call.1} parent=27 // pred_check
          %p190 = pneg %p57
        $region30: #{tpu_custom_call.1} parent=27 // pred_check_branch
          %192 = sbr.rel (%p190) target = $region32
        $region31: #{tpu_custom_call.1} parent=27 // pred_region
          %193 = dma.done %s186, 256
        $region32: #{tpu_custom_call.1} parent=27 // pred_fallthru
          _
        %s194 = sand.u32 %s72, 1
        %s195 = scalar_lea.sflag [#allocation6], %s194
        %s196 = sand.u32 %s72, 1
        %s197 = smul.addr %s196, 16
        %s198 = scalar_lea.vmem [#allocation5], %s197
        // Predicated region
        $region33: #{tpu_custom_call.1} parent=27 // pred_check
          %p199 = pneg %p85
        $region34: #{tpu_custom_call.1} parent=27 // pred_check_branch
          %201 = sbr.rel (%p199) target = $region36
        $region35: #{tpu_custom_call.1} parent=27 // pred_region
          %202 = dma.done %s195, 256
        $region36: #{tpu_custom_call.1} parent=27 // pred_fallthru
          _
        %s203 = sand.u32 %s44, 1
        %s204 = scalar_lea.sflag [#allocation3], %s203
        %s205 = sand.u32 %s44, 1
        %s206 = smul.addr %s205, 16
        %s207 = scalar_lea.vmem [#allocation2], %s206
        %p208 = pneg %p57
        %p209 = pneg %p54
        %s210 = sand.u32 %s72, 1
        %s211 = scalar_lea.sflag [#allocation6], %s210
        %s212 = sand.u32 %s72, 1
        %s213 = smul.addr %s212, 16
        %s214 = scalar_lea.vmem [#allocation5], %s213
        %p215 = pneg %p85
        %p216 = pneg %p82
        %p217 = pneg %p113
        %p218 = pneg %p110
        %s219 = sand.u32 %s100, 1
        %s220 = scalar_lea.sflag [#allocation4], %s219
        %s221 = sand.u32 %s100, 1
        %s222 = smul.addr %s221, 16
        %s223 = scalar_lea.vmem [#allocation7], %s222
        %v224 = vld [vmem:[%s189] sm:$0xff]
        %v225 = vld [vmem:[%s189 + $0x8] sm:$0xff]
        %v226 = vld [vmem:[%s198] sm:$0xff]
        %v227 = vld [vmem:[%s198 + $0x8] sm:$0xff]
        %v228 = vmul.f32 %v224, %v224
        %v229 = vmul.f32 %v225, %v225
        %vm230 = vcmask 64512
        %v231 = vsel %vm230, %v228, 0.0
        %232 = vadd.xlane.f32.xlu0 %v231
        %v233 = vpop.xlane.xlu0 %232
        %v234 = vsel %vm230, %v229, 0.0
        %235 = vadd.xlane.f32.xlu0 %v234
        %v236 = vpop.xlane.xlu0 %235
        %v237 = vmax.f32 %v233, 1e-16
        %v238 = vmax.f32 %v236, 1e-16
        %v239 = vrsqrt.pop %v237
        %v240 = vrsqrt.pop %v238
        %v241 = vmul.f32 %v224, %v239
        %v242 = vmul.f32 %v225, %v240
        %v243 = vmul.f32 %v226, %v226
        %v244 = vmul.f32 %v227, %v227
        %v245 = vsel %vm230, %v243, 0.0
        %246 = vadd.xlane.f32.xlu0 %v245
        %v247 = vpop.xlane.xlu0 %246
        %v248 = vsel %vm230, %v244, 0.0
        %249 = vadd.xlane.f32.xlu0 %v248
        %v250 = vpop.xlane.xlu0 %249
        %v251 = vmax.f32 %v247, 1e-16
        %v252 = vmax.f32 %v250, 1e-16
        %v253 = vrsqrt.pop %v251
        %v254 = vrsqrt.pop %v252
        %v255 = vmul.f32 %v226, %v253
        %v256 = vmul.f32 %v227, %v254
        %v258 = vsel %vm230, %v241, 0
        %v261 = vsel %vm230, %v242, 0
        %v264 = vsel %vm230, %v255, 0
        %v267 = vsel %vm230, %v256, 0
        %269 = vmatprep.subr.mxu0 0.0
        %270 = vmatpush1.xpose.msra.mxu0 %v264
        %271 = vmatprep.subr.mxu0 0.0
        %272 = vmatpush1.xpose.msra.mxu0 %v267
        %273 = vmatprep.subr.mxu0 0.0
        %274 = vmatpush1.xpose.msra.mxu0 0.0
        %275 = vmatprep.subr.mxu0 0.0
        %276 = vmatpush1.xpose.msra.mxu0 0.0
        %277 = vmatprep.subr.mxu0 0.0
        %278 = vmatpush1.xpose.msra.mxu0 0.0
        %279 = vmatprep.subr.mxu0 0.0
        %280 = vmatpush1.xpose.msra.mxu0 0.0
        %281 = vmatprep.subr.mxu0 0.0
        %282 = vmatpush1.xpose.msra.mxu0 0.0
        %283 = vmatprep.subr.mxu0 0.0
        %284 = vmatpush1.xpose.msra.mxu0 0.0
        %285 = vmatprep.subr.mxu0 0.0
        %286 = vmatpush1.xpose.msra.mxu0 0.0
        %287 = vmatprep.subr.mxu0 0.0
        %288 = vmatpush1.xpose.msra.mxu0 0.0
        %289 = vmatprep.subr.mxu0 0.0
        %290 = vmatpush1.xpose.msra.mxu0 0.0
        %291 = vmatprep.subr.mxu0 0.0
        %292 = vmatpush1.xpose.msra.mxu0 0.0
        %293 = vmatprep.subr.mxu0 0.0
        %294 = vmatpush1.xpose.msra.mxu0 0.0
        %295 = vmatprep.subr.mxu0 0.0
        %296 = vmatpush1.xpose.msra.mxu0 0.0
        %297 = vmatprep.subr.mxu0 0.0
        %298 = vmatpush1.xpose.msra.mxu0 0.0
        %299 = vmatprep.subr.mxu0 0.0
        %300 = vmatpush1.xpose.msra.mxu0 0.0
        %301 = vmatprep.subr.mxu0 0.0
        %302 = vmatpush1.xpose.msra.mxu0 0.0
        %303 = vmatprep.subr.mxu0 0.0
        %304 = vmatpush1.xpose.msra.mxu0 0.0
        %305 = vmatprep.subr.mxu0 0.0
        %306 = vmatpush1.xpose.msra.mxu0 0.0
        %307 = vmatprep.subr.mxu0 0.0
        %308 = vmatpush1.xpose.msra.mxu0 0.0
        %309 = vmatprep.subr.mxu0 0.0
        %310 = vmatpush1.xpose.msra.mxu0 0.0
        %311 = vmatprep.subr.mxu0 0.0
        %312 = vmatpush1.xpose.msra.mxu0 0.0
        %313 = vmatprep.subr.mxu0 0.0
        %314 = vmatpush1.xpose.msra.mxu0 0.0
        %315 = vmatprep.subr.mxu0 0.0
        %316 = vmatpush1.xpose.msra.mxu0 0.0
        %317 = vmatprep.subr.mxu0 0.0
        %318 = vmatpush1.xpose.msra.mxu0 0.0
        %319 = vmatprep.subr.mxu0 0.0
        %320 = vmatpush1.xpose.msra.mxu0 0.0
        %321 = vmatprep.subr.mxu0 0.0
        %322 = vmatpush1.xpose.msra.mxu0 0.0
        %323 = vmatprep.subr.mxu0 0.0
        %324 = vmatpush1.xpose.msra.mxu0 0.0
        %325 = vmatprep.subr.mxu0 0.0
        %326 = vmatpush1.xpose.msra.mxu0 0.0
        %327 = vmatprep.subr.mxu0 0.0
        %328 = vmatpush1.xpose.msra.mxu0 0.0
        %329 = vmatprep.subr.mxu0 0.0
        %330 = vmatpush1.xpose.msra.mxu0 0.0
        %331 = vmatprep.subr.mxu0 0.0
        %332 = vmatpush1.xpose.msra.mxu0 0.0
        %333 = vmatprep.mubr.f32.mxu0 0.0
        %334 = vmatmul.mubr.f32.gmra.mrb[0].mxu0 %v258
        %v335 = vpop.f32.mrb[0].mxu0
        %v336 = vadd.f32 0.0, %v335
        %v337 = vpop.f32.mrb[0].mxu0
        %338 = vmatprep.mubr.f32.mxu0 0.0
        %339 = vmatmul.mubr.f32.gmra.mrb[0].mxu0 %v261
        %v340 = vpop.f32.mrb[0].mxu0
        %v341 = vadd.f32 0.0, %v340
        %v342 = vpop.f32.mrb[0].mxu0
        %343 = vdwg.mxu0
        %v344 = vmax.f32 %v336, 0.0
        %v345 = vmax.f32 %v341, 0.0
        %vm346 = vcmask 130048
        %347 = vst.msk [vmem:[%s223] sm:$0xff] %vm346, %v344
        %348 = vst.msk [vmem:[%s223 + $0x8] sm:$0xff] %vm346, %v345
        %s349 = sand.u32 %s100, 1
        %s350 = scalar_lea.sflag [#allocation4], %s349
        %s351 = sand.u32 %s100, 1
        %s352 = smul.addr %s351, 16
        %s353 = scalar_lea.vmem [#allocation7], %s352
        // Predicated region
        $region37: #{tpu_custom_call.1} parent=27 // pred_check
          %p354 = pneg %p110
        $region38: #{tpu_custom_call.1} parent=27 // pred_check_branch
          %356 = sbr.rel (%p354) target = $region40
        $region39: #{tpu_custom_call.1} parent=27 // pred_region
          %s358 = ssub.s32 256, 256
          %359 = vsyncadd %s350, %s358
          %s360 = smul.addr %s27, 2
          %s361 = smul.addr %s26, 18
          %s362 = sadd.s32 %s360, %s361
          %s363 = smul.addr %s362, 128
          %s364 = scalar_lea.hbm %s2, %s363
          %s365 = sshll.u32 %s353, 4
          %s366 = int_to_ptr.vmem [resolvable:$true] %s365
          %371 = dma.vmem_to_hbm [thread:$0]  %s366, 256, %s364, %s350, 128, 128, 8
        $region40: #{tpu_custom_call.1} parent=27 // pred_fallthru
          _
      $region28: #{tpu_custom_call.1} parent=5 // pred_fallthru
        _
      %p372 = scmp.le.s32.totalorder 2, %s17
      // Predicated region
      $region41: #{tpu_custom_call.1} parent=5 // pred_check
        %p373 = pneg %p372
      $region42: #{tpu_custom_call.1} parent=5 // pred_check_branch
        %375 = sbr.rel (%p373) target = $region44
      $region43: #{tpu_custom_call.1} parent=5 // pred_region
        %s376 = ssub.s32 %s17, 2
        // Predicated region
        $region45: #{tpu_custom_call.1} parent=43 // pred_check
          %p377 = pneg %p116
        $region46: #{tpu_custom_call.1} parent=43 // pred_check_branch
          %379 = sbr.rel (%p377) target = $region48
        $region47: #{tpu_custom_call.1} parent=43 // pred_region
          %s380 = sand.u32 %s101, 1
          %s381 = scalar_lea.sflag [#allocation4], %s380
          %s382 = sand.u32 %s101, 1
          %s383 = smul.addr %s382, 16
          %s384 = scalar_lea.vmem [#allocation7], %s383
          %385 = dma.done %s381, 256
        $region48: #{tpu_custom_call.1} parent=43 // pred_fallthru
          _
      $region44: #{tpu_custom_call.1} parent=5 // pred_fallthru
        _
    $region6: #{tpu_custom_call.1} parent=1 // loop_footer
      %s21 = sadd.s32 1, %s17
    $region7: #{tpu_custom_call.1} parent=1 // loop_footer_branch
      %16 = sbr.rel target = $region3
    $region8: #{tpu_custom_call.1} parent=1 // loop_exit
      _
    %386 = vsyncpa [#allocation3], 1
    %s387 = scalar_lea.sflag [#allocation3], 1
    %388 = vsyncpa %s387, 1
    %389 = vsyncpa [#allocation6], 1
    %s390 = scalar_lea.sflag [#allocation6], 1
    %391 = vsyncpa %s390, 1
    %392 = vsyncpa [#allocation4], 1
    %s393 = scalar_lea.sflag [#allocation4], 1
    %394 = vsyncpa %s393, 1

</llo_original>
